<compile_context>
chip_gen: v6e
topology: v6e:2x2x1
jax: 0.10.0
libtpu: 0.0.40
codegen_flags: <defaults>
</compile_context>

<pallas_src>
import functools

import jax
import jax.numpy as jnp
import numpy as np
from jax import lax
from jax.experimental import pallas as pl
from jax.experimental.pallas import tpu as pltpu

_LANE = 128      # TPU vreg lane width
_SUBLANE = 8     # TPU vreg sublane count (32-bit)

_VMEM_FRACTION = 0.45   # fraction of per-core VMEM used for the working set


def _round_up(x, m):
    return ((x + m - 1) // m) * m


def _round_down(x, m):
    return (x // m) * m


def _vmem_capacity_bytes():
    """Per-core VMEM capacity; conservative fallback if the query fails."""
    try:
        info = pltpu.get_tpu_info()
        cap = getattr(info, "vmem_capacity_bytes", None)
        if cap:
            return int(cap)
    except Exception:
        pass
    return 64 << 20  # v7x per-TensorCore capacity (smallest across v5e/v6e/v7x)


def _padded_row_bytes(cols, itemsize):
    # Bytes of one row of a VMEM block with `cols` columns (lane-padded).
    return _round_up(max(int(cols), 1), _LANE) * itemsize


def _padded_block_bytes(r, c, itemsize):
    # Bytes of an (r, c) VMEM block (sublane + lane padded).
    r_pad = _round_up(max(int(r), 1), 16 if itemsize < 4 else _SUBLANE)
    return r_pad * _round_up(max(int(c), 1), _LANE) * itemsize


def _pick_row_tile(rows, per_row_bytes, fixed_bytes, budget_bytes, itemsize):
    """Rows/tile so the whole double-buffered working set fits the budget.

    Also keeps >= 4 grid steps along the (parallel) row axis when `rows`
    permits, so each v7x TensorCore gets at least two pipelined steps.
    """
    gran = _SUBLANE * max(1, 4 // max(1, itemsize))   # packed-sublane multiple
    if rows <= gran:
        return rows                                   # block == full dim
    avail = max(budget_bytes - fixed_bytes, per_row_bytes * gran)
    rt = max(gran, _round_down(avail // per_row_bytes, gran))
    quarter = max(gran, _round_up(-(-rows // 4), gran))
    rt = min(rt, quarter)
    return rows if rt >= rows else rt


def _compiler_params(dim_semantics, vmem_limit):
    return pltpu.CompilerParams(
        dimension_semantics=dim_semantics,
        vmem_limit_bytes=int(vmem_limit))


# ---------------------------------------------------------------------------
# Kernels
# ---------------------------------------------------------------------------

def _onehot_single_kernel(x_ref, sel_ref, o_ref, *, valid_lanes):
    # One MXU matmul gathers all k columns at once (exact for bf16 operands:
    # each output is one 0/1-weighted product with f32 accumulation).
    x = x_ref[...]
    if valid_lanes is not None:
        # Ragged 128-lane band: zero the garbage lanes in-kernel instead of a
        # wrapper-side full-input jnp.pad HBM pass.
        lane = lax.broadcasted_iota(jnp.int32, x.shape, 1)
        x = jnp.where(lane < valid_lanes, x, jnp.zeros_like(x))
    o_ref[...] = jnp.dot(
        x, sel_ref[...], preferred_element_type=jnp.float32
    ).astype(o_ref.dtype)


def _onehot_band_kernel(bands_ref, x_ref, sel_ref, o_ref, acc_ref, *,
                        ragged_pos, valid_lanes):
    # bands_ref: SMEM scalar prefetch, consumed only by the index_maps.
    del bands_ref
    b = pl.program_id(1)

    @pl.when(b == 0)
    def _():
        acc_ref[...] = jnp.zeros_like(acc_ref)

    x = x_ref[...]
    if ragged_pos is not None:
        lane = lax.broadcasted_iota(jnp.int32, x.shape, 1)
        keep = jnp.logical_or(b != ragged_pos, lane < valid_lanes)
        x = jnp.where(keep, x, jnp.zeros_like(x))
    acc_ref[...] += jnp.dot(x, sel_ref[...], preferred_element_type=jnp.float32)

    @pl.when(b == pl.num_programs(1) - 1)
    def _():
        o_ref[...] = acc_ref[...].astype(o_ref.dtype)


def _gather_full_kernel(x_ref, o_ref, *, idx_list):
    # Exact dtype-agnostic gather over the full trailing dim.
    # TODO(synk): a lane dynamic-gather (jnp.take) could replace the k static
    # lane slices once its Mosaic lowering is guaranteed on all generations.
    x = x_ref[...]
    cols = [x[:, i:i + 1] for i in idx_list]
    o_ref[...] = cols[0] if len(cols) == 1 else jnp.concatenate(cols, axis=-1)


def _gather_band_kernel(bands_ref, x_ref, o_ref, *, per_band):
    # Exact gather with band-limited DMA: only 128-lane bands containing a
    # requested index are read.  The output block persists across the band
    # axis; every requested column is written exactly once by its band.
    del bands_ref
    b = pl.program_id(1)
    x = x_ref[...]
    for pos, cols in enumerate(per_band):
        @pl.when(b == pos)
        def _(cols=cols):
            for out_col, in_lane in cols:
                o_ref[:, out_col:out_col + 1] = x[:, in_lane:in_lane + 1]


# ---------------------------------------------------------------------------
# pallas_call wrappers (one per path)
# ---------------------------------------------------------------------------

def _onehot_full_select(x2, idx, budget, vmem_limit):
    rows, d = x2.shape
    k = len(idx)
    it = x2.dtype.itemsize

    sel_np = np.zeros((d, k), dtype=np.float32)
    sel_np[np.asarray(idx), np.arange(k)] = 1.0
    sel = jnp.asarray(sel_np, dtype=x2.dtype)       # 0/1 exact in bf16

    per_row = (2 * _padded_row_bytes(d, it)         # double-buffered input
               + 2 * _padded_row_bytes(k, it)       # double-buffered output
               + _padded_row_bytes(k, 4))           # f32 dot result
    # TODO(synk): pipeline_mode=pl.Buffered(1) on the constant selector spec
    # would free one of these two selector buffers.
    fixed = 2 * _padded_block_bytes(d, k, it)
    rt = _pick_row_tile(rows, per_row, fixed, budget, it)

    return pl.pallas_call(
        functools.partial(_onehot_single_kernel, valid_lanes=None),
        out_shape=jax.ShapeDtypeStruct((rows, k), x2.dtype),
        grid_spec=pltpu.PrefetchScalarGridSpec(
            num_scalar_prefetch=0,
            grid=(pl.cdiv(rows, rt),),
            in_specs=[pl.BlockSpec((rt, d), lambda i: (i, 0)),
                      pl.BlockSpec((d, k), lambda i: (0, 0))],
            out_specs=pl.BlockSpec((rt, k), lambda i: (i, 0)),
        ),
        compiler_params=_compiler_params(("parallel",), vmem_limit),
        cost_estimate=pl.CostEstimate(
            flops=2 * rows * d * k, transcendentals=0,
            bytes_accessed=(rows * d + rows * k + d * k) * it),
    )(x2, sel)


def _onehot_oneband_select(x2, idx, band, budget, vmem_limit):
    rows, d = x2.shape
    k = len(idx)
    it = x2.dtype.itemsize

    sel_np = np.zeros((_LANE, k), dtype=np.float32)
    for j, i in enumerate(idx):
        sel_np[i % _LANE, j] = 1.0
    sel = jnp.asarray(sel_np, dtype=x2.dtype)

    ragged = (d % _LANE != 0) and (band == d // _LANE)
    valid_lanes = (d - band * _LANE) if ragged else None

    per_row = (2 * _padded_row_bytes(_LANE, it)
               + 2 * _padded_row_bytes(k, it)
               + _padded_row_bytes(k, 4))
    fixed = 2 * _padded_block_bytes(_LANE, k, it)
    rt = _pick_row_tile(rows, per_row, fixed, budget, it)

    return pl.pallas_call(
        functools.partial(_onehot_single_kernel, valid_lanes=valid_lanes),
        out_shape=jax.ShapeDtypeStruct((rows, k), x2.dtype),
        grid_spec=pltpu.PrefetchScalarGridSpec(
            num_scalar_prefetch=0,
            grid=(pl.cdiv(rows, rt),),
            in_specs=[
                # Band-limited DMA: only the one needed 128-lane band is read.
                pl.BlockSpec((rt, _LANE), lambda i: (i, band)),
                pl.BlockSpec((_LANE, k), lambda i: (0, 0)),
            ],
            out_specs=pl.BlockSpec((rt, k), lambda i: (i, 0)),
        ),
        compiler_params=_compiler_params(("parallel",), vmem_limit),
        cost_estimate=pl.CostEstimate(
            flops=2 * rows * _LANE * k, transcendentals=0,
            bytes_accessed=(rows * _LANE + rows * k + _LANE * k) * it),
    )(x2, sel)


def _onehot_band_select(x2, idx, bands, budget, vmem_limit):
    rows, d = x2.shape
    k = len(idx)
    n_bands = len(bands)
    it = x2.dtype.itemsize

    band_pos = {b: p for p, b in enumerate(bands)}
    sel_np = np.zeros((n_bands, _LANE, k), dtype=np.float32)
    for j, i in enumerate(idx):
        sel_np[band_pos[i // _LANE], i % _LANE, j] = 1.0
    sel = jnp.asarray(sel_np, dtype=x2.dtype)
    bands_arr = jnp.asarray(np.asarray(bands, dtype=np.int32))

    ragged_band = d // _LANE if d % _LANE != 0 else None
    ragged_pos = band_pos.get(ragged_band) if ragged_band is not None else None
    valid_lanes = (d - ragged_band * _LANE) if ragged_pos is not None else None

    per_row = (2 * _padded_row_bytes(_LANE, it)     # input band blocks
               + 2 * _padded_row_bytes(k, it)       # output blocks
               + _padded_row_bytes(k, 4))           # f32 accumulator
    fixed = 2 * _padded_block_bytes(_LANE, k, it)   # per-band selector blocks
    rt = _pick_row_tile(rows, per_row, fixed, budget, it)

    return pl.pallas_call(
        functools.partial(_onehot_band_kernel,
                          ragged_pos=ragged_pos, valid_lanes=valid_lanes),
        out_shape=jax.ShapeDtypeStruct((rows, k), x2.dtype),
        grid_spec=pltpu.PrefetchScalarGridSpec(
            num_scalar_prefetch=1,                  # bands_arr lands in SMEM
            grid=(pl.cdiv(rows, rt), n_bands),
            in_specs=[
                # Band-limited DMA: only selected 128-lane bands are read.
                pl.BlockSpec((rt, _LANE),
                             lambda i, b, bands_ref: (i, bands_ref[b])),
                pl.BlockSpec((None, _LANE, k),
                             lambda i, b, bands_ref: (b, 0, 0)),
            ],
            out_specs=pl.BlockSpec((rt, k), lambda i, b, bands_ref: (i, 0)),
            scratch_shapes=[pltpu.VMEM((rt, k), jnp.float32)],
        ),
        compiler_params=_compiler_params(("parallel", "arbitrary"), vmem_limit),
        cost_estimate=pl.CostEstimate(
            flops=2 * rows * n_bands * _LANE * k, transcendentals=0,
            bytes_accessed=(rows * n_bands * _LANE + rows * k
                            + n_bands * _LANE * k) * it),
    )(bands_arr, x2, sel)


def _gather_full_select(x2, idx, budget, vmem_limit):
    rows, d = x2.shape
    k = len(idx)
    it = x2.dtype.itemsize
    per_row = 2 * _padded_row_bytes(d, it) + 2 * _padded_row_bytes(k, it)
    rt = _pick_row_tile(rows, per_row, 0, budget, it)

    return pl.pallas_call(
        functools.partial(_gather_full_kernel, idx_list=tuple(idx)),
        out_shape=jax.ShapeDtypeStruct((rows, k), x2.dtype),
        grid_spec=pltpu.PrefetchScalarGridSpec(
            num_scalar_prefetch=0,
            grid=(pl.cdiv(rows, rt),),
            in_specs=[pl.BlockSpec((rt, d), lambda i: (i, 0))],
            out_specs=pl.BlockSpec((rt, k), lambda i: (i, 0)),
        ),
        compiler_params=_compiler_params(("parallel",), vmem_limit),
        cost_estimate=pl.CostEstimate(
            flops=0, transcendentals=0,
            bytes_accessed=(rows * d + rows * k) * it),
    )(x2)


def _gather_band_select(x2, idx, bands, budget, vmem_limit):
    rows, d = x2.shape
    k = len(idx)
    n_bands = len(bands)
    it = x2.dtype.itemsize

    band_pos = {b: p for p, b in enumerate(bands)}
    per_band = [[] for _ in range(n_bands)]
    for j, i in enumerate(idx):
        per_band[band_pos[i // _LANE]].append((j, i % _LANE))
    per_band = tuple(tuple(c) for c in per_band)
    bands_arr = jnp.asarray(np.asarray(bands, dtype=np.int32))

    per_row = 2 * _padded_row_bytes(_LANE, it) + 2 * _padded_row_bytes(k, it)
    rt = _pick_row_tile(rows, per_row, 0, budget, it)

    return pl.pallas_call(
        functools.partial(_gather_band_kernel, per_band=per_band),
        out_shape=jax.ShapeDtypeStruct((rows, k), x2.dtype),
        grid_spec=pltpu.PrefetchScalarGridSpec(
            num_scalar_prefetch=1,
            grid=(pl.cdiv(rows, rt), n_bands),
            in_specs=[pl.BlockSpec((rt, _LANE),
                                   lambda i, b, bands_ref: (i, bands_ref[b]))],
            out_specs=pl.BlockSpec((rt, k), lambda i, b, bands_ref: (i, 0)),
        ),
        compiler_params=_compiler_params(("parallel", "arbitrary"), vmem_limit),
        cost_estimate=pl.CostEstimate(
            flops=0, transcendentals=0,
            bytes_accessed=(rows * n_bands * _LANE + rows * k) * it),
    )(bands_arr, x2)


# ---------------------------------------------------------------------------
# Public wrapper: equivalent of torch `x[..., idx_list]` with static idx_list
# ---------------------------------------------------------------------------

def class_selector(x, idx_list):
    idx_raw = [int(i) for i in idx_list]
    if x.ndim == 0:
        raise ValueError("classSelector requires at least 1 dimension")
    *lead, d = x.shape

    # PyTorch semantics: negative indices wrap; out-of-range raises.
    idx = []
    for i in idx_raw:
        if not -d <= i < d:
            raise IndexError(f"index {i} is out of bounds for axis of size {d}")
        idx.append(i % d)
    k = len(idx)

    rows = int(np.prod(lead, dtype=np.int64)) if lead else 1
    if k == 0 or rows == 0:
        return jnp.zeros((*lead, k), dtype=x.dtype)

    x2 = x.reshape(rows, d)

    # Per-generation VMEM budget for the whole working set (v7x: 64 MiB/TC,
    # v5e/v6e: 128 MiB) and an explicit Mosaic VMEM limit derived from it.
    cap = _vmem_capacity_bytes()
    budget = int(cap * _VMEM_FRACTION)
    vmem_limit = min(cap, budget + (16 << 20))

    it = x2.dtype.itemsize
    bands = sorted({i // _LANE for i in idx})
    n_bands = len(bands)
    # Band-limited DMA only when it saves a meaningful fraction of the reads
    # (n_bands * 128 <= 0.7 * D); otherwise the extra grid axis is not worth it.
    band_dma = d > _LANE and n_bands * _LANE * 10 <= 7 * d

    if x.dtype.name == "bfloat16" and k <= _LANE:
        # One-hot MXU gather (bit-exact for bf16: 0/1 weights, f32 accumulate).
        # k <= 128 keeps the matmul HBM-bound even on v5e's smaller MXU.
        if band_dma and n_bands == 1:
            out2 = _onehot_oneband_select(x2, idx, bands[0], budget, vmem_limit)
        elif band_dma:
            out2 = _onehot_band_select(x2, idx, bands, budget, vmem_limit)
        else:
            sel_bytes = 2 * _padded_block_bytes(d, k, it)
            if sel_bytes > budget // 2:
                # Huge class count: D-chunked (all-bands) contraction keeps
                # row tiles large instead of a monolithic VMEM selector.
                # TODO(synk): a 256-deep contraction chunk on v6e/v7x would
                # improve MXU utilization once this drifts compute-bound.
                all_bands = list(range(pl.cdiv(d, _LANE)))
                out2 = _onehot_band_select(x2, idx, all_bands, budget,
                                           vmem_limit)
            else:
                out2 = _onehot_full_select(x2, idx, budget, vmem_limit)
    else:
        # Exact gather path: f32 (one-hot MXU matmul is not bit-exact for f32
        # operands), float16, integer dtypes, and bf16 with k > 128.
        if band_dma:
            out2 = _gather_band_select(x2, idx, bands, budget, vmem_limit)
        else:
            out2 = _gather_full_select(x2, idx, budget, vmem_limit)

    return out2.reshape(*lead, k)


if __name__ == "__main__":
    key = jax.random.PRNGKey(0)
    k1, k2, k3, k4 = jax.random.split(key, 4)

    def _check(x, idx_list, name):
        y = jax.block_until_ready(class_selector(x, idx_list))
        d = x.shape[-1]
        ref = x[..., jnp.array([i % d for i in idx_list])]
        assert y.shape == ref.shape and y.dtype == ref.dtype, (name, y.shape)
        assert jnp.array_equal(y, ref), f"{name}: mismatch vs reference gather"

    # 1) f32 NCHW input (the module's typical use) -> exact full-D path.
    x = jax.random.normal(k1, (2, 4, 16, 16), dtype=jnp.float32)
    _check(x, [3, 0, 7, 12, 5], "f32 full")

    # 2) bf16 small trailing dim -> single full one-hot MXU gather.
    xb = jax.random.normal(k2, (2, 4, 16, 16), dtype=jnp.bfloat16)
    _check(xb, [3, 0, 7, 12, 5], "bf16 one-hot full")

    # 3) bf16 wide ragged trailing dim, sparse bands (incl. the ragged last
    #    band and a negative index) -> multi-band one-hot + in-kernel mask.
    xw = jax.random.normal(k3, (4, 16, 520), dtype=jnp.bfloat16)
    _check(xw, [5, 100, 2, 519, -520], "bf16 one-hot banded ragged")

    # 4) bf16, all indices inside one 128-lane band -> single-band fast path.
    xs = jax.random.normal(k4, (4, 16, 512), dtype=jnp.bfloat16)
    _check(xs, [5, 3, 100, 77], "bf16 one-hot single band")

    # 5) f32 wide ragged trailing dim, sparse bands -> exact band-limited DMA.
    xf = jax.random.normal(k2, (2, 8, 520), dtype=jnp.float32)
    _check(xf, [5, 519, 2, -1], "f32 banded")

    # 6) int32 -> exact full-D path.
    xi = jax.random.randint(k1, (2, 3, 16, 32), minval=-100, maxval=100,
                            dtype=jnp.int32)
    _check(xi, [31, 0, 5, -1], "int32 full")

    print("KERNEL_OK")
</pallas_src>

<mosaic_0001>
module attributes {stable_mosaic.version = 11 : i64} {
  func.func @_gather_full_kernel(%arg0: i32, %arg1: memref<32x16xf32, #tpu.memory_space<vmem>>, %arg2: memref<32x5xf32, #tpu.memory_space<vmem>>) attributes {dimension_semantics = [#tpu.dimension_semantics<parallel>], iteration_bounds = array<i64: 4>, scalar_prefetch = 0 : i64, scratch_operands = 0 : i64, tpu.core_type = #tpu.core_type<tc>, window_params = [{transform_indices = @transform_0, window_bounds = array<i64: 32, 16>}, {transform_indices = @transform_1, window_bounds = array<i64: 32, 5>}]} {
    %c0 = arith.constant 0 : index
    %c0_0 = arith.constant 0 : index
    %0 = vector.load %arg1[%c0, %c0_0] : memref<32x16xf32, #tpu.memory_space<vmem>>, vector<32x16xf32>
    %1 = vector.extract_strided_slice %0 {offsets = [0, 3], sizes = [32, 1], strides = [1, 1]} : vector<32x16xf32> to vector<32x1xf32>
    %2 = vector.extract_strided_slice %0 {offsets = [0, 0], sizes = [32, 1], strides = [1, 1]} : vector<32x16xf32> to vector<32x1xf32>
    %3 = vector.extract_strided_slice %0 {offsets = [0, 7], sizes = [32, 1], strides = [1, 1]} : vector<32x16xf32> to vector<32x1xf32>
    %4 = vector.extract_strided_slice %0 {offsets = [0, 12], sizes = [32, 1], strides = [1, 1]} : vector<32x16xf32> to vector<32x1xf32>
    %5 = vector.extract_strided_slice %0 {offsets = [0, 5], sizes = [32, 1], strides = [1, 1]} : vector<32x16xf32> to vector<32x1xf32>
    %6 = tpu.concatenate %1, %2, %3, %4, %5 in 1 : vector<32x1xf32>, vector<32x1xf32>, vector<32x1xf32>, vector<32x1xf32>, vector<32x1xf32> -> vector<32x5xf32>
    %c0_1 = arith.constant 0 : index
    %c0_2 = arith.constant 0 : index
    %7 = vector.load %arg2[%c0_1, %c0_2] : memref<32x5xf32, #tpu.memory_space<vmem>>, vector<32x5xf32>
    tpu.vector_store %arg2[%c0_1, %c0_2], %6 {strides = array<i32>} : memref<32x5xf32, #tpu.memory_space<vmem>>, vector<32x5xf32>,
    return
  }
  func.func @transform_0(%arg0: i32) -> (i32, i32) {
    %c0_i32 = arith.constant 0 : i32
    %c0_i32_0 = arith.constant 0 : i32
    return %arg0, %c0_i32 : i32, i32
  }
  func.func @transform_1(%arg0: i32) -> (i32, i32) {
    %c0_i32 = arith.constant 0 : i32
    %c0_i32_0 = arith.constant 0 : i32
    return %arg0, %c0_i32 : i32, i32
  }
}

</mosaic_0001>

<llo_original>
// kernel: tpu_custom_call.1
$region0: #{tpu_custom_call.1}
  #allocation0 [shape = 'u32[]', space=smem, size = 0x4, offset = 0x4, fixed_abs, tag = 'smem constant byte address 0x4 - core index']
  #allocation1 [shape = 'u32[144,128]{1,0:T(1,128)}', space=vmem, size = 0x12000, scoped, tag = 'internal scratch']
  %s0 = inlined_call_operand.vmem [shape: f32[128,16], index: 0, kind: input, shape index: {}]
  %s1 = inlined_call_operand.vmem [shape: f32[128,5], index: 1, kind: output, shape index: {}]
  %s2 = sld [smem:[#allocation0]]
  $region37: #{tpu_custom_call.1} parent=0
    _
  %s4 = ssub.s32 1, %s2
  %s5 = scalar_select 0, %s4, %s2
  loop: start=0, step=1, limit=6
  $region2: #{tpu_custom_call.1} parent=0 // loop_pre_header
    _
  $region3: #{tpu_custom_call.1} parent=0 // loop_header
    %s7 = sphi 0, %s11
    %p8 = scmp.ge.s32.totalorder %s7, 6
    %s17 = sphi 0, %s19
    %s20 = sphi 0, %s17
    %s21 = sphi 0, %s20
    %s37 = sphi 0, %s21
    %s43 = sphi 0, %s45
    %s46 = sphi 0, %s43
    %s47 = sphi 0, %s46
    %s63 = sphi 0, %s47
  $region4: #{tpu_custom_call.1} parent=0 // loop_header_branch
    %10 = sbr.rel (%p8) target = $region8
  $region5: #{tpu_custom_call.1} parent=0 // loop_body
    %s12 = ssub.s32 %s7, 1
    %s13 = ssub.s32 %s7, 2
    %s14 = sadd.s32 %s7, 1
    %s15 = ssub.s32 %s7, %s14
    %p16 = scmp.eq.s32.totalorder %s15, 0
    %s18 = sadd.s32 %s17, 1
    %s19 = scalar_select %p16, %s17, %s18
    %p22 = pneg %p16
    %p23 = scmp.eq.s32.totalorder %s7, 3
    %p24 = por %p22, %p23
    %p25 = scmp.ne.s32.totalorder %s17, %s20
    %p26 = scmp.eq.s32.totalorder %s7, 0
    %p27 = por %p25, %p26
    %p28 = scmp.ne.s32.totalorder %s17, %s20
    %p29 = scmp.eq.s32.totalorder %s12, 3
    %p30 = por %p28, %p29
    %p31 = scmp.ne.s32.totalorder %s20, %s21
    %p32 = scmp.eq.s32.totalorder %s12, 0
    %p33 = por %p31, %p32
    %p34 = scmp.ne.s32.totalorder %s20, %s21
    %p35 = scmp.eq.s32.totalorder %s13, 3
    %p36 = por %p34, %p35
    %p38 = scmp.ne.s32.totalorder %s21, %s37
    %p39 = scmp.eq.s32.totalorder %s13, 0
    %p40 = por %p38, %p39
    %s41 = ssub.s32 %s7, %s14
    %p42 = scmp.eq.s32.totalorder %s41, 0
    %s44 = sadd.s32 %s43, 1
    %s45 = scalar_select %p42, %s43, %s44
    %p48 = pneg %p42
    %p49 = scmp.eq.s32.totalorder %s7, 3
    %p50 = por %p48, %p49
    %p51 = scmp.ne.s32.totalorder %s43, %s46
    %p52 = scmp.eq.s32.totalorder %s7, 0
    %p53 = por %p51, %p52
    %p54 = scmp.ne.s32.totalorder %s43, %s46
    %p55 = scmp.eq.s32.totalorder %s12, 3
    %p56 = por %p54, %p55
    %p57 = scmp.ne.s32.totalorder %s46, %s47
    %p58 = scmp.eq.s32.totalorder %s12, 0
    %p59 = por %p57, %p58
    %p60 = scmp.ne.s32.totalorder %s46, %s47
    %p61 = scmp.eq.s32.totalorder %s13, 3
    %p62 = por %p60, %p61
    %p64 = scmp.ne.s32.totalorder %s47, %s63
    %p65 = scmp.eq.s32.totalorder %s13, 0
    %p66 = por %p64, %p65
    %p67 = scmp.le.s32.totalorder 1, %s7
    %p68 = scmp.lt.s32.totalorder %s7, 5
    %p69 = pnand %p67, %p68
    %p70 = pneg %p69
    // Predicated region
    $region9: #{tpu_custom_call.1} parent=5 // pred_check
      _
    $region10: #{tpu_custom_call.1} parent=5 // pred_check_branch
      %72 = sbr.rel (%p69) target = $region12
    $region11: #{tpu_custom_call.1} parent=5 // pred_region
      %s73 = ssub.s32 %s7, 1
    $region12: #{tpu_custom_call.1} parent=5 // pred_fallthru
      _
    %p74 = scmp.lt.s32.totalorder %s7, 4
    // Predicated region
    $region13: #{tpu_custom_call.1} parent=5 // pred_check
      %p75 = pneg %p74
    $region14: #{tpu_custom_call.1} parent=5 // pred_check_branch
      %77 = sbr.rel (%p75) target = $region16
    $region15: #{tpu_custom_call.1} parent=5 // pred_region
      // Predicated region
      $region17: #{tpu_custom_call.1} parent=15 // pred_check
        %p78 = pneg %p27
      $region18: #{tpu_custom_call.1} parent=15 // pred_check_branch
        %80 = sbr.rel (%p78) target = $region20
      $region19: #{tpu_custom_call.1} parent=15 // pred_region
        %s81 = smul.u32 4, %s7
        %p82 = scmp.lt.s32.totalorder %s81, 15
        %s83 = scalar_select %p82, %s81, 15
        %s84 = smul.addr %s83, 8
        %s85 = scalar_lea.vmem %s0, %s84
        %s86 = smul.u32 4, %s7
      $region20: #{tpu_custom_call.1} parent=15 // pred_fallthru
        _
    $region16: #{tpu_custom_call.1} parent=5 // pred_fallthru
      _
    %p87 = scmp.le.s32.totalorder 1, %s7
    %p88 = scmp.lt.s32.totalorder %s7, 5
    %p89 = pnand %p87, %p88
    %p90 = pneg %p89
    // Predicated region
    $region21: #{tpu_custom_call.1} parent=5 // pred_check
      _
    $region22: #{tpu_custom_call.1} parent=5 // pred_check_branch
      %92 = sbr.rel (%p89) target = $region24
    $region23: #{tpu_custom_call.1} parent=5 // pred_region
      %s93 = ssub.s32 %s7, 1
      %s94 = smul.u32 4, %s12
      %p95 = scmp.lt.s32.totalorder %s94, 15
      %s96 = scalar_select %p95, %s94, 15
      %s97 = smul.addr %s96, 8
      %s98 = scalar_lea.vmem %s0, %s97
      %p99 = pneg %p33
      %p100 = pneg %p30
      %p101 = pneg %p59
      %p102 = pneg %p56
      %s103 = smul.u32 4, %s12
      %p104 = scmp.lt.s32.totalorder %s103, 15
      %s105 = scalar_select %p104, %s103, 15
      %s106 = smul.addr %s105, 8
      %s107 = scalar_lea.vmem %s1, %s106
      %s108 = smul.u32 4, %s12
      %p109 = scmp.lt.s32.totalorder %s108, 15
      %s110 = scalar_select %p109, %s108, 15
      %s111 = smul.addr %s110, 8
      %s112 = scalar_lea.vmem %s0, %s111
      %s113 = smul.u32 4, %s12
      %s114 = smul.u32 4, %s12
      %p115 = scmp.lt.s32.totalorder %s114, 15
      %s116 = scalar_select %p115, %s114, 15
      %s117 = smul.addr %s116, 8
      %s118 = scalar_lea.vmem %s1, %s117
      %s119 = smul.u32 4, %s12
      %v120 = vld [vmem:[%s112] sm:$0xff]
      %v121 = vld [vmem:[%s112 + $0x8] sm:$0xff]
      %v122 = vld [vmem:[%s112 + $0x10] sm:$0xff]
      %v123 = vld [vmem:[%s112 + $0x18] sm:$0xff]
      %128 = vrot.lane.b32.xlu0 %v120, 125
      %v129 = vpop.permute.xlu0 %128
      %130 = vrot.lane.b32.xlu0 %v121, 125
      %v131 = vpop.permute.xlu0 %130
      %132 = vrot.lane.b32.xlu0 %v122, 125
      %v133 = vpop.permute.xlu0 %132
      %134 = vrot.lane.b32.xlu0 %v123, 125
      %v135 = vpop.permute.xlu0 %134
      %140 = vrot.lane.b32.xlu0 %v120, 1
      %v141 = vpop.permute.xlu0 %140
      %142 = vrot.lane.b32.xlu0 %v121, 1
      %v143 = vpop.permute.xlu0 %142
      %144 = vrot.lane.b32.xlu0 %v122, 1
      %v145 = vpop.permute.xlu0 %144
      %146 = vrot.lane.b32.xlu0 %v123, 1
      %v147 = vpop.permute.xlu0 %146
      %152 = vrot.lane.b32.xlu0 %v120, 123
      %v153 = vpop.permute.xlu0 %152
      %154 = vrot.lane.b32.xlu0 %v121, 123
      %v155 = vpop.permute.xlu0 %154
      %156 = vrot.lane.b32.xlu0 %v122, 123
      %v157 = vpop.permute.xlu0 %156
      %158 = vrot.lane.b32.xlu0 %v123, 123
      %v159 = vpop.permute.xlu0 %158
      %164 = vrot.lane.b32.xlu0 %v120, 119
      %v165 = vpop.permute.xlu0 %164
      %166 = vrot.lane.b32.xlu0 %v121, 119
      %v167 = vpop.permute.xlu0 %166
      %168 = vrot.lane.b32.xlu0 %v122, 119
      %v169 = vpop.permute.xlu0 %168
      %170 = vrot.lane.b32.xlu0 %v123, 119
      %v171 = vpop.permute.xlu0 %170
      %176 = vrot.lane.b32.xlu0 %v120, 127
      %v177 = vpop.permute.xlu0 %176
      %178 = vrot.lane.b32.xlu0 %v121, 127
      %v179 = vpop.permute.xlu0 %178
      %180 = vrot.lane.b32.xlu0 %v122, 127
      %v181 = vpop.permute.xlu0 %180
      %182 = vrot.lane.b32.xlu0 %v123, 127
      %v183 = vpop.permute.xlu0 %182
      %vm188 = vcmask 7168
      %v189 = vsel %vm188, %v129, %v141
      %v190 = vsel %vm188, %v131, %v143
      %v191 = vsel %vm188, %v133, %v145
      %v192 = vsel %vm188, %v135, %v147
      %vm193 = vcmask 15360
      %v194 = vsel %vm193, %v189, %v153
      %v195 = vsel %vm193, %v190, %v155
      %v196 = vsel %vm193, %v191, %v157
      %v197 = vsel %vm193, %v192, %v159
      %vm198 = vcmask 23552
      %v199 = vsel %vm198, %v194, %v165
      %v200 = vsel %vm198, %v195, %v167
      %v201 = vsel %vm198, %v196, %v169
      %v202 = vsel %vm198, %v197, %v171
      %vm203 = vcmask 31744
      %v204 = vsel %vm203, %v199, %v177
      %v205 = vsel %vm203, %v200, %v179
      %v206 = vsel %vm203, %v201, %v181
      %v207 = vsel %vm203, %v202, %v183
      %vm208 = vcmask 39936
      %209 = vst.msk [vmem:[%s118] sm:$0xff] %vm208, %v204
      %210 = vst.msk [vmem:[%s118 + $0x8] sm:$0xff] %vm208, %v205
      %211 = vst.msk [vmem:[%s118 + $0x10] sm:$0xff] %vm208, %v206
      %212 = vst.msk [vmem:[%s118 + $0x18] sm:$0xff] %vm208, %v207
      %s213 = smul.u32 4, %s12
      %p214 = scmp.lt.s32.totalorder %s213, 15
      %s215 = scalar_select %p214, %s213, 15
      %s216 = smul.addr %s215, 8
      %s217 = scalar_lea.vmem %s1, %s216
      // Predicated region
      $region25: #{tpu_custom_call.1} parent=23 // pred_check
        %p218 = pneg %p56
      $region26: #{tpu_custom_call.1} parent=23 // pred_check_branch
        %220 = sbr.rel (%p218) target = $region28
      $region27: #{tpu_custom_call.1} parent=23 // pred_region
        %s221 = smul.u32 4, %s12
      $region28: #{tpu_custom_call.1} parent=23 // pred_fallthru
        _
    $region24: #{tpu_custom_call.1} parent=5 // pred_fallthru
      _
    %p222 = scmp.le.s32.totalorder 2, %s7
    // Predicated region
    $region29: #{tpu_custom_call.1} parent=5 // pred_check
      %p223 = pneg %p222
    $region30: #{tpu_custom_call.1} parent=5 // pred_check_branch
      %225 = sbr.rel (%p223) target = $region32
    $region31: #{tpu_custom_call.1} parent=5 // pred_region
      %s226 = ssub.s32 %s7, 2
      // Predicated region
      $region33: #{tpu_custom_call.1} parent=31 // pred_check
        %p227 = pneg %p62
      $region34: #{tpu_custom_call.1} parent=31 // pred_check_branch
        %229 = sbr.rel (%p227) target = $region36
      $region35: #{tpu_custom_call.1} parent=31 // pred_region
        %s230 = smul.u32 4, %s13
        %p231 = scmp.lt.s32.totalorder %s230, 15
        %s232 = scalar_select %p231, %s230, 15
        %s233 = smul.addr %s232, 8
        %s234 = scalar_lea.vmem %s1, %s233
      $region36: #{tpu_custom_call.1} parent=31 // pred_fallthru
        _
    $region32: #{tpu_custom_call.1} parent=5 // pred_fallthru
      _
  $region6: #{tpu_custom_call.1} parent=0 // loop_footer
    %s11 = sadd.s32 1, %s7
  $region7: #{tpu_custom_call.1} parent=0 // loop_footer_branch
    %6 = sbr.rel target = $region3
  $region8: #{tpu_custom_call.1} parent=0 // loop_exit
    _

</llo_original>
